<compile_context>
chip_gen: v7x
topology: tpu7x:2x2x1
jax: 0.10.0
libtpu: 0.0.40
codegen_flags: <defaults>
</compile_context>

<pallas_src>
import jax
import jax.numpy as jnp
from jax.experimental import pallas as pl
from jax.experimental.pallas import tpu as pltpu

_LANE = 128                           # TPU lane width (last-dim vreg tile)
_MAX_LANES = 1024                     # widen rows up to 1024 lanes
_MAX_BLOCK_BYTES = 8 * 1024 * 1024    # 8 MiB block; 2-in + 2-out bufs = 32 MiB
_MIN_SPLIT_BYTES = 1 * 1024 * 1024    # force >=2 grid steps above this size
_VMEM_LIMIT_BYTES = 48 * 1024 * 1024  # headroom under v7x's 64 MiB physical


# ---------------------------------------------------------------------------
# Zero-traffic path: the output buffer is aliased to the input buffer, so the
# kernel body has nothing to do (no DMA, no VMEM, no vector work).
# ---------------------------------------------------------------------------
def _noop_kernel(x_ref, o_ref):
    del x_ref, o_ref  # aliased HBM buffers; identity requires no data movement


def _identity_aliased(x: jax.Array) -> jax.Array:
    return pl.pallas_call(
        _noop_kernel,
        out_shape=jax.ShapeDtypeStruct(x.shape, x.dtype),
        in_specs=[pl.BlockSpec(memory_space=pl.ANY)],
        out_specs=pl.BlockSpec(memory_space=pl.ANY),
        input_output_aliases={0: 0},
    )(x)


# ---------------------------------------------------------------------------
# Materializing copy path: lane-dense streaming copy at HBM roofline, for
# callers that explicitly need a fresh output buffer.
# ---------------------------------------------------------------------------
def _copy_kernel(x_ref, o_ref):
    # Full-tile unmasked load + store per block.
    o_ref[...] = x_ref[...]


def _pick_block_rows(rows: int, max_block_rows: int, sublane: int) -> int:
    if rows <= max_block_rows:
        return rows                      # single full-extent block
    best = (max_block_rows // sublane) * sublane
    d = best
    while d >= sublane:                  # prefer an exact divisor of rows so
        if rows % d == 0:                # the last block isn't partial/masked
            return d
        d -= sublane
    return best                          # no divisor: partial last block (OK)


def _identity_copy(x: jax.Array) -> jax.Array:
    orig_shape = x.shape
    total = x.size
    itemsize = jnp.dtype(x.dtype).itemsize

    if total % _LANE != 0:
        # Non-lane-aligned element count: don't stage the whole array as one
        # VMEM block (can exceed VMEM on v7x); the aliased zero-copy path
        # handles any shape with no DMA at all.
        return _identity_aliased(x)

    # dtype-aware sublane multiple: 8 (f32), 16 (bf16), 32 (int8/fp8)
    sublane = max(8, 32 // itemsize)

    # Lane-dense 2D slab: lanes a multiple of 128, widened toward _MAX_LANES
    # while it still divides the element count.
    rows = total // _LANE
    lanes = _LANE
    while lanes * 2 <= _MAX_LANES and rows % 2 == 0:
        lanes *= 2
        rows //= 2
    flat = x.reshape(rows, lanes)

    row_bytes = lanes * itemsize
    max_block_rows = max(
        sublane, (_MAX_BLOCK_BYTES // row_bytes) // sublane * sublane)
    if total * itemsize >= _MIN_SPLIT_BYTES and rows >= 2 * sublane:
        # Guarantee >=2 grid steps so v7x's two TensorCores each stream half.
        half = max(sublane, (rows // 2) // sublane * sublane)
        max_block_rows = min(max_block_rows, half)
    block_rows = _pick_block_rows(rows, max_block_rows, sublane)
    grid = (pl.cdiv(rows, block_rows),)

    out = pl.pallas_call(
        _copy_kernel,
        out_shape=jax.ShapeDtypeStruct((rows, lanes), x.dtype),
        grid_spec=pltpu.PrefetchScalarGridSpec(
            num_scalar_prefetch=0,
            grid=grid,
            in_specs=[pl.BlockSpec((block_rows, lanes), lambda i: (i, 0))],
            out_specs=pl.BlockSpec((block_rows, lanes), lambda i: (i, 0)),
        ),
        compiler_params=pltpu.CompilerParams(
            dimension_semantics=("parallel",),       # v7x dual-TC sharding
            vmem_limit_bytes=_VMEM_LIMIT_BYTES,
        ),
        cost_estimate=pl.CostEstimate(
            flops=0, transcendentals=0, bytes_accessed=2 * total * itemsize),
    )(flat)
    return out.reshape(orig_shape)


def identity(x: jax.Array, *, materialize_copy: bool = False) -> jax.Array:
    """Pallas implementation of Identity.forward: returns x unchanged.

    Default path aliases the output to the input (zero HBM traffic).  Set
    materialize_copy=True to force a fresh, physically distinct output buffer
    via a roofline streaming copy.
    """
    if x.size == 0:
        return x
    if materialize_copy:
        return _identity_copy(x)
    return _identity_aliased(x)


if __name__ == "__main__":
    key = jax.random.PRNGKey(0)
    x = jax.random.normal(key, (2, 4, 16, 16), dtype=jnp.float32)

    # Primary zero-traffic (aliased) path.
    y = identity(x)
    jax.block_until_ready(y)
    assert y.shape == x.shape and y.dtype == x.dtype
    assert bool(jnp.array_equal(y, x))

    # Materializing streaming-copy path, exercised for coverage.
    y2 = identity(x, materialize_copy=True)
    jax.block_until_ready(y2)
    assert y2.shape == x.shape and y2.dtype == x.dtype
    assert bool(jnp.array_equal(y2, x))

    print("KERNEL_OK")
</pallas_src>

<mosaic_0001>
module attributes {stable_mosaic.version = 11 : i64} {
  func.func @_noop_kernel(%arg0: memref<2x4x16x16xf32, #tpu.memory_space<any>>, %arg1: memref<2x4x16x16xf32, #tpu.memory_space<any>>) attributes {dimension_semantics = [], scalar_prefetch = 0 : i64, scratch_operands = 0 : i64, tpu.core_type = #tpu.core_type<tc>} {
    return
  }
}

</mosaic_0001>

<llo_original>
// kernel: tpu_custom_call.1
$region0: #{tpu_custom_call.1}
  #allocation0 [shape = 'u32[]', space=smem, size = 0x4, offset = 0x4, fixed_abs, tag = 'smem constant byte address 0x4 - core index']
  #allocation1 [shape = 'u32[144,128]{1,0:T(1,128)}', space=vmem, size = 0x12000, scoped, tag = 'internal scratch']
  %s0 = inlined_call_operand.hbm [shape: f32[2,4,16,16], index: 0, kind: input, shape index: {}, may-alias: {0,1}]
  %s1 = inlined_call_operand.hbm [shape: f32[2,4,16,16], index: 1, kind: output, shape index: {}, may-alias: {0,1}]
  %s2 = sld [smem:[#allocation0]]
  $region2: #{tpu_custom_call.1} parent=0
    _
  %s4 = ssub.s32 1, %s2
  %s5 = scalar_select 0, %s4, %s2

</llo_original>
